<compile_context>
chip_gen: v5e
topology: v5e:2x2
jax: 0.10.0
libtpu: 0.0.40
codegen_flags: <defaults>
</compile_context>

<pallas_src>
import math

import jax
import jax.numpy as jnp
import numpy as np
from jax.experimental import pallas as pl
from jax.experimental.pallas import tpu as pltpu


# Synthetic node-feature dims (stand-in for get_node_feature_dims()).
NODE_FEATURE_DIMS = [8, 6, 4, 2]          # D_total = 20
EMB_DIM = 32
PACK = 4                                  # 4 * EMB_DIM == 128 output lanes


def _xavier_uniform(key, out_dim, in_dim, dtype=jnp.float32):
    # Matches torch.nn.init.xavier_uniform_ for a Linear weight [out, in].
    limit = math.sqrt(6.0 / (in_dim + out_dim))
    return jax.random.uniform(key, (out_dim, in_dim), dtype=dtype,
                              minval=-limit, maxval=limit)


def init_node_encoder_params(key, emb_dim=EMB_DIM, dims=NODE_FEATURE_DIMS):
    """Per-slice Linear params, like the PyTorch ModuleList."""
    weights, biases = [], []
    for d in dims:
        kw, kb, key = jax.random.split(key, 3)
        w = _xavier_uniform(kw, emb_dim, d)                       # [emb, d]
        # torch Linear bias default init: U(-1/sqrt(fan_in), 1/sqrt(fan_in))
        bound = 1.0 / math.sqrt(d)
        b = jax.random.uniform(kb, (emb_dim,), jnp.float32, -bound, bound)
        weights.append(w)
        biases.append(b)
    return weights, biases


def fuse_params(weights, biases, pack=PACK):
    """Collapse the sum-of-linears into one (W, b), then lane-dense repack:
    W_bd = block_diag(W x pack) : [pack*D, pack*E], b_bd = tile(b, pack)."""
    w_cat = jnp.concatenate(weights, axis=1)                       # [E, D_total]
    w_fused = jnp.transpose(w_cat, (1, 0))                         # [D_total, E]
    b_fused = sum(biases)                                          # [E]
    D, E = w_fused.shape
    w_bd = jnp.zeros((pack * D, pack * E), jnp.float32)
    for p in range(pack):
        w_bd = w_bd.at[p * D:(p + 1) * D, p * E:(p + 1) * E].set(w_fused)
    b_bd = jnp.tile(b_fused, pack)[None, :]                        # [1, pack*E]
    # Weight is tiny; cast once here (one-time prep). Bias stays f32.
    return w_bd.astype(jnp.bfloat16), b_bd.astype(jnp.float32)


def _node_encoder_kernel(x_ref, w_ref, b_ref, o_ref):
    # x_ref: (tile, 80) input dtype   w_ref: (80, 128) bf16   b_ref: (1, 128) f32
    # o_ref: (tile, 128) out dtype (lane-dense)
    x = x_ref[...].astype(jnp.bfloat16)            # in-kernel cast (VPU filler)
    acc = jnp.dot(x, w_ref[...], preferred_element_type=jnp.float32)
    o_ref[...] = (acc + b_ref[...]).astype(o_ref.dtype)


def _choose_tile(n_packed, tile_hint):
    """Row-tile in packed rows. Single full block for small problems; otherwise
    aligned (>=16, prefer 256) with >= 2 grid steps so v7x megacore balances."""
    tile_hint = max(1, int(tile_hint))
    if n_packed <= tile_hint and n_packed <= 512:
        return n_packed                            # block == full array dims
    tile = min(tile_hint, pl.cdiv(n_packed, 2))    # ensure >= 2 grid steps
    align = 256 if tile >= 256 else 16
    tile = max(align, (tile // align) * align)
    return min(tile, n_packed)


def _vmem_limit_bytes(tile, dp, ep, in_itemsize, out_itemsize):
    """Padded, double-buffered VMEM footprint of the row tiles. Only override
    the compiler's scoped default when needed; cap at 32 MiB (v7x-safe)."""
    lanes_in = ((dp + 127) // 128) * 128
    lanes_out = ((ep + 127) // 128) * 128
    need = 2 * tile * lanes_in * in_itemsize       # x tile, 2 buffers
    need += 2 * tile * lanes_out * out_itemsize    # out tile, 2 buffers
    need += 1 << 20                                # weight/bias/headroom
    if need <= (14 << 20):                         # fits v5e's 16 MiB default
        return None
    return min(int(need * 5 // 4), 32 << 20)


def node_encoder_forward(x, w_bd, b_bd, *, tile_p=8192,
                         out_dtype=jnp.bfloat16, pack=PACK):
    N, D = x.shape
    DP, EP = w_bd.shape
    assert DP == pack * D
    E = EP // pack

    # Pad rows to a multiple of `pack` so (N, D) -> (N/pack, pack*D) is a
    # row-major view; padded rows are sliced off the output.
    n_pad = pl.cdiv(N, pack) * pack
    if n_pad != N:
        x = jnp.pad(x, ((0, n_pad - N), (0, 0)))
    n_packed = n_pad // pack
    x_packed = x.reshape(n_packed, pack * D)       # (N/4, 80), lane-dense-ish

    tile = _choose_tile(n_packed, tile_p)
    grid = (pl.cdiv(n_packed, tile),)              # ragged last block is masked

    in_it = jnp.dtype(x.dtype).itemsize
    out_it = jnp.dtype(out_dtype).itemsize
    cost = pl.CostEstimate(
        flops=2 * n_packed * DP * EP,
        transcendentals=0,
        bytes_accessed=(n_packed * DP * in_it + DP * EP * 2 + EP * 4
                        + n_packed * EP * out_it),
    )

    out_packed = pl.pallas_call(
        _node_encoder_kernel,
        out_shape=jax.ShapeDtypeStruct((n_packed, EP), out_dtype),
        grid_spec=pltpu.PrefetchScalarGridSpec(
            num_scalar_prefetch=0,
            grid=grid,
            in_specs=[
                pl.BlockSpec((tile, DP), lambda i: (i, 0)),   # packed x row-tile
                pl.BlockSpec((DP, EP), lambda i: (0, 0)),     # block-diag W (VMEM-resident)
                pl.BlockSpec((1, EP), lambda i: (0, 0)),      # tiled bias (VMEM-resident)
            ],
            out_specs=pl.BlockSpec((tile, EP), lambda i: (i, 0)),
        ),
        compiler_params=pltpu.CompilerParams(
            dimension_semantics=("parallel",),                # megacore on v7x
            vmem_limit_bytes=_vmem_limit_bytes(tile, DP, EP, in_it, out_it),
        ),
        cost_estimate=cost,
    )(x_packed, w_bd, b_bd)

    out = out_packed.reshape(n_pad, E)             # exact inverse of the repack
    if n_pad != N:
        out = out[:N]
    return out


def node_encoder_reference(x, weights, biases, dims=NODE_FEATURE_DIMS):
    """Plain-JAX replica of the PyTorch forward loop (slice-wise linears, summed)."""
    out = 0.0
    off = 0
    for i, d in enumerate(dims):
        out = out + x[:, off:off + d] @ weights[i].T + biases[i]
        off += d
    return out


if __name__ == "__main__":
    key = jax.random.PRNGKey(0)
    k_params, k_x1, k_x2 = jax.random.split(key, 3)

    weights, biases = init_node_encoder_params(k_params)
    w_bd, b_bd = fuse_params(weights, biases)
    D_total = sum(NODE_FEATURE_DIMS)

    # bf16-rounded copies for the reference (kernel feeds bf16 operands into
    # the MXU and accumulates / bias-adds in f32).
    def _q(a):
        return a.astype(jnp.bfloat16).astype(jnp.float32)
    weights_q = [_q(w) for w in weights]

    # Case 1: small shape, N multiple of PACK, whole problem in one block,
    # default bf16 output.
    N1 = 16
    x1 = jax.random.normal(k_x1, (N1, D_total), dtype=jnp.float32)
    out1 = jax.block_until_ready(node_encoder_forward(x1, w_bd, b_bd))
    assert out1.shape == (N1, EMB_DIM) and out1.dtype == jnp.bfloat16
    ref1 = node_encoder_reference(_q(x1), weights_q, biases)
    np.testing.assert_allclose(np.asarray(out1.astype(jnp.float32)),
                               np.asarray(ref1), rtol=2e-2, atol=2e-2)

    # Case 2: N not a multiple of PACK (exercises the pad/unpad path), tiny
    # tile to force a multi-step grid with a ragged last block, f32 output.
    N2 = 150
    x2 = jax.random.normal(k_x2, (N2, D_total), dtype=jnp.float32)
    out2 = jax.block_until_ready(
        node_encoder_forward(x2, w_bd, b_bd, tile_p=16, out_dtype=jnp.float32))
    assert out2.shape == (N2, EMB_DIM) and out2.dtype == jnp.float32
    ref2 = node_encoder_reference(_q(x2), weights_q, biases)
    np.testing.assert_allclose(np.asarray(out2), np.asarray(ref2),
                               rtol=1e-4, atol=1e-4)

    print("KERNEL_OK")
</pallas_src>

<mosaic_0001>
module attributes {stable_mosaic.version = 11 : i64} {
  func.func @_node_encoder_kernel(%arg0: i32, %arg1: memref<4x80xf32, #tpu.memory_space<vmem>>, %arg2: memref<80x128xbf16, #tpu.memory_space<vmem>>, %arg3: memref<1x128xf32, #tpu.memory_space<vmem>>, %arg4: memref<4x128xbf16, #tpu.memory_space<vmem>>) attributes {dimension_semantics = [#tpu.dimension_semantics<parallel>], iteration_bounds = array<i64: 1>, scalar_prefetch = 0 : i64, scratch_operands = 0 : i64, tpu.core_type = #tpu.core_type<tc>, window_params = [{transform_indices = @transform_0, window_bounds = array<i64: 4, 80>}, {pipeline_mode = #tpu.pipeline_mode<synchronous>, transform_indices = @transform_1, window_bounds = array<i64: 80, 128>}, {pipeline_mode = #tpu.pipeline_mode<synchronous>, transform_indices = @transform_2, window_bounds = array<i64: 1, 128>}, {transform_indices = @transform_3, window_bounds = array<i64: 4, 128>}]} {
    %c0 = arith.constant 0 : index
    %c0_0 = arith.constant 0 : index
    %0 = vector.load %arg1[%c0, %c0_0] : memref<4x80xf32, #tpu.memory_space<vmem>>, vector<4x80xf32>
    %1 = arith.truncf %0 : vector<4x80xf32> to vector<4x80xbf16>
    %c0_1 = arith.constant 0 : index
    %c0_2 = arith.constant 0 : index
    %2 = vector.load %arg2[%c0_1, %c0_2] : memref<80x128xbf16, #tpu.memory_space<vmem>>, vector<80x128xbf16>
    %cst = arith.constant dense<0.000000e+00> : vector<4x128xf32>
    %3 = tpu.matmul %1, %2, %cst {dimension_numbers = #tpu.dot_dimension_numbers<[1], [0], [0], [1], [0, 0, 1, 1], [], []>} : vector<4x80xbf16>, vector<80x128xbf16>, vector<4x128xf32> -> vector<4x128xf32>
    %c0_3 = arith.constant 0 : index
    %c0_4 = arith.constant 0 : index
    %4 = vector.load %arg3[%c0_3, %c0_4] : memref<1x128xf32, #tpu.memory_space<vmem>>, vector<1x128xf32>
    %5 = vector.broadcast %4 : vector<1x128xf32> to vector<4x128xf32>
    %6 = arith.addf %3, %5 : vector<4x128xf32>
    %7 = arith.truncf %6 : vector<4x128xf32> to vector<4x128xbf16>
    %c0_5 = arith.constant 0 : index
    %c0_6 = arith.constant 0 : index
    %8 = vector.load %arg4[%c0_5, %c0_6] : memref<4x128xbf16, #tpu.memory_space<vmem>>, vector<4x128xbf16>
    tpu.vector_store %arg4[%c0_5, %c0_6], %7 {strides = array<i32>} : memref<4x128xbf16, #tpu.memory_space<vmem>>, vector<4x128xbf16>,
    return
  }
  func.func @transform_0(%arg0: i32) -> (i32, i32) {
    %c0_i32 = arith.constant 0 : i32
    %c0_i32_0 = arith.constant 0 : i32
    return %arg0, %c0_i32 : i32, i32
  }
  func.func @transform_1(%arg0: i32) -> (i32, i32) {
    %c0_i32 = arith.constant 0 : i32
    %c0_i32_0 = arith.constant 0 : i32
    %c0_i32_1 = arith.constant 0 : i32
    return %c0_i32, %c0_i32_0 : i32, i32
  }
  func.func @transform_2(%arg0: i32) -> (i32, i32) {
    %c0_i32 = arith.constant 0 : i32
    %c0_i32_0 = arith.constant 0 : i32
    %c0_i32_1 = arith.constant 0 : i32
    return %c0_i32, %c0_i32_0 : i32, i32
  }
  func.func @transform_3(%arg0: i32) -> (i32, i32) {
    %c0_i32 = arith.constant 0 : i32
    %c0_i32_0 = arith.constant 0 : i32
    return %arg0, %c0_i32 : i32, i32
  }
}

</mosaic_0001>

<llo_original>
// kernel: tpu_custom_call.1
$region0: #{tpu_custom_call.1}
  #allocation0 [shape = 'u32[]', space=smem, size = 0x4, offset = 0x4, fixed_abs, tag = 'smem constant byte address 0x4 - core index']
  #allocation1 [shape = 'u32[72,128]{1,0:T(1,128)}', space=vmem, size = 0x9000, scoped, tag = 'internal scratch']
  %s0 = inlined_call_operand.hbm [shape: f32[4,80], index: 0, kind: input, shape index: {}]
  %s1 = inlined_call_operand.hbm [shape: bf16[80,128], index: 1, kind: input, shape index: {}]
  %s2 = inlined_call_operand.vmem [shape: f32[1,128], index: 2, kind: input, shape index: {}]
  %s3 = inlined_call_operand.hbm [shape: bf16[4,128], index: 3, kind: output, shape index: {}]
  %s4 = sld [smem:[#allocation0]]
  $region30: #{tpu_custom_call.1} parent=0
    _
  %s6 = ssub.s32 1, %s4
  %s7 = scalar_select 0, %s6, %s4
  $region1: #{tpu_custom_call.1} parent=0
    #allocation2 [shape = 'u8[2048]{0}', space=vmem, size = 0x800, scoped, tag = 'input window, operand 0, single buffered']
    #allocation3 [shape = 's32[1]{0}', space=sflag, size = 0x4, scoped, tag = 'scoped memory for tpu_custom_call.1']
    #allocation4 [shape = 's32[1]{0}', space=sflag, size = 0x4, scoped, tag = 'scoped memory for tpu_custom_call.1']
    #allocation5 [shape = 'u8[20480]{0}', space=vmem, size = 0x5000, scoped, tag = 'input window, operand 1, single buffered']
    #allocation6 [shape = 's32[1]{0}', space=sflag, size = 0x4, scoped, tag = 'scoped memory for tpu_custom_call.1']
    #allocation7 [shape = 'u8[1024]{0}', space=vmem, size = 0x400, scoped, tag = 'output window, operand 0, single buffered']
    %8 = vsyncpa [#allocation3], 0
    %9 = vsyncpa [#allocation6], 0
    %10 = vsyncpa [#allocation4], 0
    // Predicated region
    $region2: #{tpu_custom_call.1} parent=1 // pred_check
      _
    $region3: #{tpu_custom_call.1} parent=1 // pred_check_branch
      %12 = sbr.rel (0) target = $region5
    $region4: #{tpu_custom_call.1} parent=1 // pred_region
      %14 = vsyncadd [#allocation3], 0
      %s16 = sshll.u32 %s0, 4
      %s17 = int_to_ptr.hbm [resolvable:$true] %s16
      %s18 = sshll.u32 [#allocation2], 4
      %s19 = int_to_ptr.vmem [resolvable:$true] %s18
      %21 = dma.hbm_to_vmem [thread:$0]  %s17, 64, %s19, [#allocation3]
    $region5: #{tpu_custom_call.1} parent=1 // pred_fallthru
      _
    // Predicated region
    $region6: #{tpu_custom_call.1} parent=1 // pred_check
      _
    $region7: #{tpu_custom_call.1} parent=1 // pred_check_branch
      %23 = sbr.rel (0) target = $region9
    $region8: #{tpu_custom_call.1} parent=1 // pred_region
      %25 = vsyncadd [#allocation6], 0
      %s26 = sshll.u32 %s1, 4
      %s27 = int_to_ptr.hbm [resolvable:$true] %s26
      %s28 = sshll.u32 [#allocation5], 4
      %s29 = int_to_ptr.vmem [resolvable:$true] %s28
      %34 = dma.hbm_to_vmem [thread:$0]  %s27, 640, %s29, [#allocation6], 64, 64, 4
    $region9: #{tpu_custom_call.1} parent=1 // pred_fallthru
      _
    // Predicated region
    $region10: #{tpu_custom_call.1} parent=1 // pred_check
      _
    $region11: #{tpu_custom_call.1} parent=1 // pred_check_branch
      %36 = sbr.rel (0) target = $region13
    $region12: #{tpu_custom_call.1} parent=1 // pred_region
      _
    $region13: #{tpu_custom_call.1} parent=1 // pred_fallthru
      _
    // Predicated region
    $region14: #{tpu_custom_call.1} parent=1 // pred_check
      _
    $region15: #{tpu_custom_call.1} parent=1 // pred_check_branch
      %38 = sbr.rel (0) target = $region17
    $region16: #{tpu_custom_call.1} parent=1 // pred_region
      %40 = dma.done [#allocation3], 64
    $region17: #{tpu_custom_call.1} parent=1 // pred_fallthru
      _
    // Predicated region
    $region18: #{tpu_custom_call.1} parent=1 // pred_check
      _
    $region19: #{tpu_custom_call.1} parent=1 // pred_check_branch
      %42 = sbr.rel (0) target = $region21
    $region20: #{tpu_custom_call.1} parent=1 // pred_region
      %44 = dma.done [#allocation6], 640
    $region21: #{tpu_custom_call.1} parent=1 // pred_fallthru
      _
    %v46 = vld [vmem:[#allocation2] sm:$0xf]
    %v47 = vpack.c.bf16 %v46, %v46
    %v48 = vld [vmem:[#allocation5] sm:$0xf]
    %v49 = vld [vmem:[#allocation5 + $0x4] sm:$0xf]
    %v50 = vld [vmem:[#allocation5 + $0x8] sm:$0xf]
    %v51 = vld [vmem:[#allocation5 + $0xc] sm:$0xf]
    %v52 = vld [vmem:[#allocation5 + $0x10] sm:$0xf]
    %v53 = vld [vmem:[#allocation5 + $0x14] sm:$0xf]
    %v54 = vld [vmem:[#allocation5 + $0x18] sm:$0xf]
    %v55 = vld [vmem:[#allocation5 + $0x1c] sm:$0xf]
    %v56 = vld [vmem:[#allocation5 + $0x20] sm:$0xf]
    %v57 = vld [vmem:[#allocation5 + $0x24] sm:$0xf]
    %v58 = vld [vmem:[%s2] sm:$0x1]
    %v60 = vperm.slane %v58, 0
    %v72 = vunpack.c.l.b16 %v48
    %v73 = vunpack.c.l.b16 %v49
    %v74 = vunpack.c.l.b16 %v50
    %v75 = vunpack.c.l.b16 %v51
    %v76 = vunpack.c.l.b16 %v52
    %v77 = vunpack.c.l.b16 %v53
    %v78 = vunpack.c.l.b16 %v54
    %v79 = vunpack.c.l.b16 %v55
    %v80 = vunpack.c.l.b16 %v56
    %v81 = vunpack.c.l.b16 %v57
    %v82 = vpack.c.b16 %v73, %v72
    %v83 = vpack.c.b16 %v75, %v74
    %v84 = vpack.c.b16 %v77, %v76
    %v85 = vpack.c.b16 %v79, %v78
    %v86 = vpack.c.b16 %v81, %v80
    %vm92 = vcmask 654336
    %v94 = vsel %vm92, %v47, 0
    %96 = vmatpush.bf16.msra.mxu0 0
    %97 = vmatpush.bf16.msra.mxu0 0
    %98 = vmatpush.bf16.msra.mxu0 0
    %99 = vmatpush.bf16.msra.mxu0 %v86
    %100 = vmatpush.bf16.msra.mxu0 %v85
    %101 = vmatpush.bf16.msra.mxu0 %v84
    %102 = vmatpush.bf16.msra.mxu0 %v83
    %103 = vmatpush.bf16.msra.mxu0 %v82
    %104 = vmatmul.bf16.gmra.mxu0 %v94
    %v105 = vpop.f32.mrf.mxu0
    %v106 = vadd.f32 %v60, %v105
    %v107 = vpop.f32.mrf.mxu0
    %108 = vdwg.mxu0
    %v109 = vpack.c.bf16 %v106, %v106
    %110 = vst [vmem:[#allocation7] sm:$0x3] %v109
    // Predicated region
    $region22: #{tpu_custom_call.1} parent=1 // pred_check
      _
    $region23: #{tpu_custom_call.1} parent=1 // pred_check_branch
      %112 = sbr.rel (0) target = $region25
    $region24: #{tpu_custom_call.1} parent=1 // pred_region
      %114 = vsyncadd [#allocation4], 0
      %s116 = sshll.u32 [#allocation7], 4
      %s117 = int_to_ptr.vmem [resolvable:$true] %s116
      %s118 = sshll.u32 %s3, 4
      %s119 = int_to_ptr.hbm [resolvable:$true] %s118
      %121 = dma.vmem_to_hbm [thread:$0]  %s117, 32, %s119, [#allocation4]
    $region25: #{tpu_custom_call.1} parent=1 // pred_fallthru
      _
    // Predicated region
    $region26: #{tpu_custom_call.1} parent=1 // pred_check
      _
    $region27: #{tpu_custom_call.1} parent=1 // pred_check_branch
      %123 = sbr.rel (0) target = $region29
    $region28: #{tpu_custom_call.1} parent=1 // pred_region
      %125 = dma.done [#allocation4], 32
    $region29: #{tpu_custom_call.1} parent=1 // pred_fallthru
      _
    %126 = vsyncpa [#allocation3], 1
    %127 = vsyncpa [#allocation6], 1
    %128 = vsyncpa [#allocation4], 1

</llo_original>
